<compile_context>
chip_gen: v7x
topology: tpu7x:2x2x1
jax: 0.10.0
libtpu: 0.0.40
codegen_flags: <defaults>
</compile_context>

<pallas_src>
import functools

import jax
import jax.numpy as jnp
from jax import lax
from jax.experimental import pallas as pl
from jax.experimental.pallas import tpu as pltpu

LN_EPS = 1e-5


def _round_up(n, m):
    return ((n + m - 1) // m) * m


# ----------------------------------------------------------------------------
# Pallas kernels
# ----------------------------------------------------------------------------
def _layer_norm(h, gamma, beta):
    mu = jnp.mean(h, axis=-1, keepdims=True)
    var = jnp.mean(jnp.square(h - mu), axis=-1, keepdims=True)
    return (h - mu) * lax.rsqrt(var + LN_EPS) * gamma + beta


def _conv_relu_ln(h, w_flat, b, gamma, beta, kernel_size):
    """K-tap 'same' Conv1d along the row (time) axis fused into one MXU dot.

    h      : (M, Cin) f32, M = (#segments in tile) * seg_len, time-major.
    w_flat : (K*Cin, Cout) bf16 -- conv taps flattened along the contraction dim.
    Shifted copies of h are gathered with pltpu.roll (XLU) and concatenated along the
    channel (lane) axis; correct zero 'same'-padding across segment boundaries relies
    on the caller guaranteeing >= (K-1)//2 all-zero rows at the tail of every segment
    (rolls then always pull zero rows across boundaries, including the tile wrap).
    """
    M = h.shape[0]
    pad = (kernel_size - 1) // 2
    parts = []
    for k in range(kernel_size):
        s = pad - k                          # tap k reads x[t + k - pad]
        parts.append(h if s == 0 else pltpu.roll(h, s % M, axis=0))
    hcat = parts[0] if kernel_size == 1 else jnp.concatenate(parts, axis=-1)
    acc = jnp.dot(hcat.astype(jnp.bfloat16), w_flat,
                  preferred_element_type=jnp.float32) + b
    acc = jnp.maximum(acc, 0.0)              # ReLU
    return _layer_norm(acc, gamma, beta)     # (dropout: identity at inference)


def _predictor_math(x, w1, b1, g1, be1, w2, b2, g2, be2, wl_t, bl,
                    kernel_size, seg_len, true_len):
    """Full VariancePredictor on a folded (M, D) tile; returns an (M, 1) column."""
    M = x.shape[0]
    h = _conv_relu_ln(x, w1, b1, g1, be1, kernel_size)
    # Zero the artificial tail-pad rows of every segment so conv2 sees the same zero
    # 'same'-padding the reference sees at sequence end / next-segment start.
    tpos = lax.rem(lax.broadcasted_iota(jnp.int32, (M, 1), 0), jnp.int32(seg_len))
    h = jnp.where(tpos < true_len, h, 0.0)
    h = _conv_relu_ln(h, w2, b2, g2, be2, kernel_size)
    # Linear(C -> 1) head: (M, C) @ (C, 1).  Flops negligible; avoids the full (M, C)
    # XLU transpose that an "oc,mc->om" einsum would require.  Mask applied in wrapper.
    return jnp.dot(h.astype(jnp.bfloat16), wl_t,
                   preferred_element_type=jnp.float32) + bl


def _vp_kernel(x_ref,
               w1_ref, b1_ref, g1_ref, be1_ref,
               w2_ref, b2_ref, g2_ref, be2_ref,
               wl_ref, bl_ref,
               out_ref, *, kernel_size, seg_len, true_len):
    out_ref[...] = _predictor_math(
        x_ref[...],
        w1_ref[...], b1_ref[...], g1_ref[...], be1_ref[...],
        w2_ref[...], b2_ref[...], g2_ref[...], be2_ref[...],
        wl_ref[...], bl_ref[...], kernel_size, seg_len, true_len)


def _vp_fused_add_kernel(x_ref, emb_ref,
                         w1_ref, b1_ref, g1_ref, be1_ref,
                         w2_ref, b2_ref, g2_ref, be2_ref,
                         wl_ref, bl_ref,
                         out_ref, xsum_ref, *, kernel_size, seg_len, true_len):
    # fused residual add: x <- x + emb (also written out for downstream use)
    xs = x_ref[...] + emb_ref[...]
    xsum_ref[...] = xs
    out_ref[...] = _predictor_math(
        xs,
        w1_ref[...], b1_ref[...], g1_ref[...], be1_ref[...],
        w2_ref[...], b2_ref[...], g2_ref[...], be2_ref[...],
        wl_ref[...], bl_ref[...], kernel_size, seg_len, true_len)


def _segments_per_tile(batch, seg_len, target_rows):
    """Largest divisor of `batch` whose tile (#segs * seg_len rows) fits target_rows,
    reduced if possible so the grid has >= 2 steps (pipelining / megacore)."""
    divisors = [d for d in range(1, batch + 1) if batch % d == 0]
    fitting = [d for d in divisors if d * seg_len <= target_rows] or [1]
    best = max(fitting)
    if batch >= 2:
        smaller = [d for d in fitting if batch // d >= 2]
        if smaller:
            best = max(smaller)
    return best


def variance_predictor(params, x, mask, emb=None, *, target_rows=1024):
    """x: (B, T, D) f32; mask: (B, T) bool (True = padding).
    emb (optional): (B, T, D) residual added to x inside the kernel (fused).
    Returns masked (B, T) prediction, plus (B, T, D) x+emb when `emb` is given."""
    B, T, D = x.shape
    K, _, C = params["w1"].shape
    pad = (K - 1) // 2
    # >= pad guaranteed all-zero rows at the tail of every per-batch segment so that
    # cross-segment rolls always pull zeros ('same' padding without boundary selects).
    Tp = _round_up(T + max(pad, 1), 8)
    sp = _segments_per_tile(B, Tp, target_rows)
    tile = sp * Tp
    Mp = B * Tp
    grid = (Mp // tile,)

    x_p = jnp.pad(x, ((0, 0), (0, Tp - T), (0, 0))).reshape(Mp, D)

    # Weights: conv taps flattened to one (K*Cin, Cout) matrix, pre-cast to bf16 once.
    w1f = params["w1"].reshape(K * D, C).astype(jnp.bfloat16)
    w2f = params["w2"].reshape(K * C, C).astype(jnp.bfloat16)
    wl_t = params["wl"].reshape(C, 1).astype(jnp.bfloat16)
    weight_args = (w1f, params["b1"], params["g1"], params["be1"],
                   w2f, params["b2"], params["g2"], params["be2"],
                   wl_t, params["bl"])
    weight_specs = [
        pl.BlockSpec((K * D, C), lambda i: (0, 0)),
        pl.BlockSpec((1, C), lambda i: (0, 0)),
        pl.BlockSpec((1, C), lambda i: (0, 0)),
        pl.BlockSpec((1, C), lambda i: (0, 0)),
        pl.BlockSpec((K * C, C), lambda i: (0, 0)),
        pl.BlockSpec((1, C), lambda i: (0, 0)),
        pl.BlockSpec((1, C), lambda i: (0, 0)),
        pl.BlockSpec((1, C), lambda i: (0, 0)),
        pl.BlockSpec((C, 1), lambda i: (0, 0)),
        pl.BlockSpec((1, 1), lambda i: (0, 0)),
    ]
    dense_spec = pl.BlockSpec((tile, D), lambda i: (i, 0))
    pred_spec = pl.BlockSpec((tile, 1), lambda i: (i, 0))

    n_dense_io = 3 if emb is not None else 1
    cost = pl.CostEstimate(
        flops=int(Mp * (2 * K * D * C + 2 * K * C * C + 2 * C)),
        transcendentals=int(2 * Mp),                 # one rsqrt per row per LayerNorm
        bytes_accessed=int(4 * (n_dense_io * Mp * D + Mp)
                           + 2 * (K * D * C + K * C * C + C)
                           + 4 * (8 * C + 1)),
    )
    cp = pltpu.CompilerParams(
        dimension_semantics=("parallel",),
        vmem_limit_bytes=48 * 1024 * 1024,
    )

    if emb is None:
        kern = functools.partial(_vp_kernel, kernel_size=K, seg_len=Tp, true_len=T)
        out = pl.pallas_call(
            kern,
            out_shape=jax.ShapeDtypeStruct((Mp, 1), jnp.float32),
            grid=grid,
            in_specs=[dense_spec] + weight_specs,
            out_specs=pred_spec,
            compiler_params=cp,
            cost_estimate=cost,
        )(x_p, *weight_args)
        pred = out.reshape(B, Tp)[:, :T]
        return jnp.where(mask, 0.0, pred)

    emb_p = jnp.pad(emb, ((0, 0), (0, Tp - T), (0, 0))).reshape(Mp, D)
    kern = functools.partial(_vp_fused_add_kernel, kernel_size=K, seg_len=Tp, true_len=T)
    out, xsum = pl.pallas_call(
        kern,
        out_shape=(jax.ShapeDtypeStruct((Mp, 1), jnp.float32),
                   jax.ShapeDtypeStruct((Mp, D), jnp.float32)),
        grid=grid,
        in_specs=[dense_spec, dense_spec] + weight_specs,
        out_specs=(pred_spec, dense_spec),
        compiler_params=cp,
        cost_estimate=cost,
    )(x_p, emb_p, *weight_args)
    pred = jnp.where(mask, 0.0, out.reshape(B, Tp)[:, :T])
    xsum = xsum.reshape(B, Tp, D)[:, :T, :]
    return pred, xsum


def _add_kernel(a_ref, b_ref, o_ref):
    o_ref[...] = a_ref[...] + b_ref[...]


def pallas_add(a, b, row_tile=1024):
    """Elementwise add of two (B, M, D) arrays, row-tiled for DMA/compute pipelining."""
    B, M, D = a.shape
    rows = B * M
    a2 = a.reshape(rows, D)
    b2 = b.reshape(rows, D)
    tile = min(row_tile, rows)
    tile = max(8, (tile // 8) * 8)               # keep (8, lane) layout rule
    rp = pl.cdiv(rows, tile) * tile
    if rp != rows:
        a2 = jnp.pad(a2, ((0, rp - rows), (0, 0)))
        b2 = jnp.pad(b2, ((0, rp - rows), (0, 0)))
    out = pl.pallas_call(
        _add_kernel,
        out_shape=jax.ShapeDtypeStruct((rp, D), a.dtype),
        grid=(rp // tile,),
        in_specs=[pl.BlockSpec((tile, D), lambda i: (i, 0)),
                  pl.BlockSpec((tile, D), lambda i: (i, 0))],
        out_specs=pl.BlockSpec((tile, D), lambda i: (i, 0)),
        compiler_params=pltpu.CompilerParams(
            dimension_semantics=("parallel",),
            vmem_limit_bytes=32 * 1024 * 1024),
    )(a2, b2)
    return out[:rows].reshape(B, M, D)


# ----------------------------------------------------------------------------
# Plain-JAX glue (data-dependent gather / embedding lookups)
# ----------------------------------------------------------------------------
def length_regulator(x, durations, max_len):
    """Repeat each frame x[b, i] durations[b, i] times; pad/crop to max_len."""
    B, T_src, D = x.shape
    mel_lens = jnp.sum(durations, axis=1).astype(jnp.int32)     # (B,)
    cum = jnp.cumsum(durations, axis=1)                         # (B, T_src)
    frames = jnp.arange(max_len, dtype=jnp.int32)               # (max_len,)
    # phoneme index of frame t = #{i : cum[i] <= t}
    idx = jnp.sum(frames[None, :, None] >= cum[:, None, :], axis=-1)
    idx = jnp.clip(idx, 0, T_src - 1)                           # (B, max_len)
    gather_idx = jnp.broadcast_to(idx[..., None], (B, max_len, D))
    expanded = jnp.take_along_axis(x, gather_idx, axis=1)       # (B, max_len, D)
    valid = frames[None, :] < mel_lens[:, None]                 # (B, max_len)
    expanded = jnp.where(valid[..., None], expanded, 0.0)
    return expanded, mel_lens


def get_mask_from_lengths(lengths, max_len):
    frames = jnp.arange(max_len, dtype=jnp.int32)
    return frames[None, :] >= lengths[:, None]                  # True = padding


def bucketize(values, boundaries):
    # matches torch.bucketize(values, boundaries, right=False)
    return jnp.sum(values[..., None] > boundaries, axis=-1).astype(jnp.int32)


# ----------------------------------------------------------------------------
# Parameter init (deterministic, synthetic)
# ----------------------------------------------------------------------------
def init_variance_predictor_params(key, d_in, conv_chans, kernel_size):
    ks = jax.random.split(key, 6)
    s = 0.05
    return dict(
        w1=jax.random.normal(ks[0], (kernel_size, d_in, conv_chans), jnp.float32) * s,
        b1=jax.random.normal(ks[1], (1, conv_chans), jnp.float32) * s,
        g1=jnp.ones((1, conv_chans), jnp.float32),
        be1=jnp.zeros((1, conv_chans), jnp.float32),
        w2=jax.random.normal(ks[2], (kernel_size, conv_chans, conv_chans), jnp.float32) * s,
        b2=jax.random.normal(ks[3], (1, conv_chans), jnp.float32) * s,
        g2=jnp.ones((1, conv_chans), jnp.float32),
        be2=jnp.zeros((1, conv_chans), jnp.float32),
        wl=jax.random.normal(ks[4], (1, conv_chans), jnp.float32) * s,   # (1, C) row
        bl=jax.random.normal(ks[5], (1, 1), jnp.float32) * s,
    )


def init_variance_adaptor_params(key, d_in, conv_chans=32, kernel_size=3, n_bins=32):
    ks = jax.random.split(key, 6)
    # synthetic stand-in for data/final_LJSpeech/stats.json
    pitch_min, pitch_max = -2.0, 8.0
    energy_min, energy_max = -1.5, 7.0
    return dict(
        duration=init_variance_predictor_params(ks[0], d_in, conv_chans, kernel_size),
        pitch=init_variance_predictor_params(ks[1], d_in, conv_chans, kernel_size),
        energy=init_variance_predictor_params(ks[2], d_in, conv_chans, kernel_size),
        pitch_bins=jnp.linspace(pitch_min, pitch_max, n_bins - 1),
        energy_bins=jnp.linspace(energy_min, energy_max, n_bins - 1),
        pitch_embedding=jax.random.normal(ks[3], (n_bins, d_in), jnp.float32) * 0.05,
        energy_embedding=jax.random.normal(ks[4], (n_bins, d_in), jnp.float32) * 0.05,
    )


# ----------------------------------------------------------------------------
# VarianceAdaptor forward
# ----------------------------------------------------------------------------
def variance_adaptor_forward(params, x, dur_trg=None, pitch_trg=None, energy_trg=None,
                             src_mask=None, max_dur=None,
                             p_control=1.0, e_control=1.0, d_control=1.0):
    B, T_src, D = x.shape
    if src_mask is None:
        src_mask = jnp.zeros((B, T_src), bool)

    # duration prediction (Pallas)
    log_dur_pred = variance_predictor(params["duration"], x, src_mask)       # (B, T_src)
    dur_rounded = jnp.maximum(jnp.round(jnp.exp(log_dur_pred) - 1.0) * d_control, 0.0)

    # length regulation (plain JAX: data-dependent repeat/gather)
    if dur_trg is not None:
        x_mel, mel_durs = length_regulator(x, dur_trg, max_dur)              # (B, M, D)
        dur_rounded = dur_trg
    else:
        x_mel, mel_durs = length_regulator(x, dur_rounded.astype(jnp.int32), max_dur)
    mel_mask = get_mask_from_lengths(mel_durs, max_dur)                      # (B, M) bool

    # pitch (Pallas predictor on pre-add x, like the reference)
    pitch_pred = variance_predictor(params["pitch"], x_mel, mel_mask) * p_control
    if pitch_trg is not None:
        pitch_idx = bucketize(pitch_trg, params["pitch_bins"])
    else:
        pitch_idx = bucketize(pitch_pred, params["pitch_bins"])
    pitch_emb = params["pitch_embedding"][pitch_idx]                         # (B, M, D)

    # energy predictor with the `x + pitch_emb` residual add fused into the kernel
    energy_pred, x_mel = variance_predictor(params["energy"], x_mel, mel_mask,
                                            emb=pitch_emb)
    energy_pred = energy_pred * e_control
    if energy_trg is not None:
        # reproduces the reference implementation (it bucketizes pitch_trg here)
        energy_idx = bucketize(pitch_trg, params["pitch_bins"])
    else:
        energy_idx = bucketize(energy_pred, params["energy_bins"])
    energy_emb = params["energy_embedding"][energy_idx]
    x_out = pallas_add(x_mel, energy_emb)

    return (x_out, mel_mask, log_dur_pred, dur_rounded,
            pitch_pred, pitch_emb, energy_pred, energy_emb)


# ----------------------------------------------------------------------------
# Demo
# ----------------------------------------------------------------------------
if __name__ == "__main__":
    B, T_SRC, D_IN = 2, 8, 32
    CONV_CHANS, KSIZE, N_BINS = 32, 3, 32
    MAX_DUR = 24  # static mel length (>= max sum of durations)

    root = jax.random.PRNGKey(0)
    k_par, k_x, k_dur, k_pitch = jax.random.split(root, 4)

    params = init_variance_adaptor_params(k_par, D_IN, CONV_CHANS, KSIZE, N_BINS)

    x = jax.random.normal(k_x, (B, T_SRC, D_IN), jnp.float32)

    src_lens = jnp.array([8, 6], dtype=jnp.int32)
    src_mask = jnp.arange(T_SRC)[None, :] >= src_lens[:, None]               # True = pad

    dur_trg = jax.random.randint(k_dur, (B, T_SRC), 1, 4).astype(jnp.int32)
    dur_trg = jnp.where(src_mask, 0, dur_trg)

    pitch_trg = jax.random.uniform(k_pitch, (B, MAX_DUR), jnp.float32,
                                   minval=-2.0, maxval=8.0)

    outs = variance_adaptor_forward(params, x, dur_trg, pitch_trg,
                                    energy_trg=None, src_mask=src_mask,
                                    max_dur=MAX_DUR)
    outs = jax.block_until_ready(outs)

    (x_out, mel_mask, log_dur_pred, dur_rounded,
     pitch_pred, pitch_emb, energy_pred, energy_emb) = outs
    assert x_out.shape == (B, MAX_DUR, D_IN)
    assert mel_mask.shape == (B, MAX_DUR)
    assert log_dur_pred.shape == (B, T_SRC)
    assert pitch_pred.shape == (B, MAX_DUR)
    assert energy_emb.shape == (B, MAX_DUR, D_IN)
    print("KERNEL_OK")
</pallas_src>

<mosaic_0001>
module attributes {stable_mosaic.version = 11 : i64} {
  func.func @_vp_kernel(%arg0: i32, %arg1: memref<16x32xf32, #tpu.memory_space<vmem>>, %arg2: memref<96x32xbf16, #tpu.memory_space<vmem>>, %arg3: memref<1x32xf32, #tpu.memory_space<vmem>>, %arg4: memref<1x32xf32, #tpu.memory_space<vmem>>, %arg5: memref<1x32xf32, #tpu.memory_space<vmem>>, %arg6: memref<96x32xbf16, #tpu.memory_space<vmem>>, %arg7: memref<1x32xf32, #tpu.memory_space<vmem>>, %arg8: memref<1x32xf32, #tpu.memory_space<vmem>>, %arg9: memref<1x32xf32, #tpu.memory_space<vmem>>, %arg10: memref<32x1xbf16, #tpu.memory_space<vmem>>, %arg11: memref<1x1xf32, #tpu.memory_space<vmem>>, %arg12: memref<16x1xf32, #tpu.memory_space<vmem>>) attributes {dimension_semantics = [#tpu.dimension_semantics<parallel>], iteration_bounds = array<i64: 2>, scalar_prefetch = 0 : i64, scratch_operands = 0 : i64, tpu.core_type = #tpu.core_type<tc>, window_params = [{transform_indices = @transform_0, window_bounds = array<i64: 16, 32>}, {pipeline_mode = #tpu.pipeline_mode<synchronous>, transform_indices = @transform_1, window_bounds = array<i64: 96, 32>}, {pipeline_mode = #tpu.pipeline_mode<synchronous>, transform_indices = @transform_2, window_bounds = array<i64: 1, 32>}, {pipeline_mode = #tpu.pipeline_mode<synchronous>, transform_indices = @transform_3, window_bounds = array<i64: 1, 32>}, {pipeline_mode = #tpu.pipeline_mode<synchronous>, transform_indices = @transform_4, window_bounds = array<i64: 1, 32>}, {pipeline_mode = #tpu.pipeline_mode<synchronous>, transform_indices = @transform_5, window_bounds = array<i64: 96, 32>}, {pipeline_mode = #tpu.pipeline_mode<synchronous>, transform_indices = @transform_6, window_bounds = array<i64: 1, 32>}, {pipeline_mode = #tpu.pipeline_mode<synchronous>, transform_indices = @transform_7, window_bounds = array<i64: 1, 32>}, {pipeline_mode = #tpu.pipeline_mode<synchronous>, transform_indices = @transform_8, window_bounds = array<i64: 1, 32>}, {pipeline_mode = #tpu.pipeline_mode<synchronous>, transform_indices = @transform_9, window_bounds = array<i64: 32, 1>}, {pipeline_mode = #tpu.pipeline_mode<synchronous>, transform_indices = @transform_10, window_bounds = array<i64: 1, 1>}, {transform_indices = @transform_11, window_bounds = array<i64: 16, 1>}]} {
    %c0 = arith.constant 0 : index
    %c0_0 = arith.constant 0 : index
    %0 = vector.load %arg1[%c0, %c0_0] : memref<16x32xf32, #tpu.memory_space<vmem>>, vector<16x32xf32>
    %c0_1 = arith.constant 0 : index
    %c0_2 = arith.constant 0 : index
    %1 = vector.load %arg2[%c0_1, %c0_2] : memref<96x32xbf16, #tpu.memory_space<vmem>>, vector<96x32xbf16>
    %c0_3 = arith.constant 0 : index
    %c0_4 = arith.constant 0 : index
    %2 = vector.load %arg3[%c0_3, %c0_4] : memref<1x32xf32, #tpu.memory_space<vmem>>, vector<1x32xf32>
    %c0_5 = arith.constant 0 : index
    %c0_6 = arith.constant 0 : index
    %3 = vector.load %arg4[%c0_5, %c0_6] : memref<1x32xf32, #tpu.memory_space<vmem>>, vector<1x32xf32>
    %c0_7 = arith.constant 0 : index
    %c0_8 = arith.constant 0 : index
    %4 = vector.load %arg5[%c0_7, %c0_8] : memref<1x32xf32, #tpu.memory_space<vmem>>, vector<1x32xf32>
    %c0_9 = arith.constant 0 : index
    %c0_10 = arith.constant 0 : index
    %5 = vector.load %arg6[%c0_9, %c0_10] : memref<96x32xbf16, #tpu.memory_space<vmem>>, vector<96x32xbf16>
    %c0_11 = arith.constant 0 : index
    %c0_12 = arith.constant 0 : index
    %6 = vector.load %arg7[%c0_11, %c0_12] : memref<1x32xf32, #tpu.memory_space<vmem>>, vector<1x32xf32>
    %c0_13 = arith.constant 0 : index
    %c0_14 = arith.constant 0 : index
    %7 = vector.load %arg8[%c0_13, %c0_14] : memref<1x32xf32, #tpu.memory_space<vmem>>, vector<1x32xf32>
    %c0_15 = arith.constant 0 : index
    %c0_16 = arith.constant 0 : index
    %8 = vector.load %arg9[%c0_15, %c0_16] : memref<1x32xf32, #tpu.memory_space<vmem>>, vector<1x32xf32>
    %c0_17 = arith.constant 0 : index
    %c0_18 = arith.constant 0 : index
    %9 = vector.load %arg10[%c0_17, %c0_18] : memref<32x1xbf16, #tpu.memory_space<vmem>>, vector<32x1xbf16>
    %c0_19 = arith.constant 0 : index
    %c0_20 = arith.constant 0 : index
    %10 = vector.load %arg11[%c0_19, %c0_20] : memref<1x1xf32, #tpu.memory_space<vmem>>, vector<1x1xf32>
    %c1_i32 = arith.constant 1 : i32
    %11 = tpu.dynamic_rotate %0 by %c1_i32 dim 0 : vector<16x32xf32>, i32 -> vector<16x32xf32>
    %c15_i32 = arith.constant 15 : i32
    %12 = tpu.dynamic_rotate %0 by %c15_i32 dim 0 : vector<16x32xf32>, i32 -> vector<16x32xf32>
    %13 = tpu.concatenate %11, %0, %12 in 1 : vector<16x32xf32>, vector<16x32xf32>, vector<16x32xf32> -> vector<16x96xf32>
    %14 = arith.truncf %13 : vector<16x96xf32> to vector<16x96xbf16>
    %cst = arith.constant dense<0.000000e+00> : vector<16x32xf32>
    %15 = tpu.matmul %14, %1, %cst {dimension_numbers = #tpu.dot_dimension_numbers<[1], [0], [0], [1], [0, 0, 1, 1], [], []>} : vector<16x96xbf16>, vector<96x32xbf16>, vector<16x32xf32> -> vector<16x32xf32>
    %16 = vector.broadcast %2 : vector<1x32xf32> to vector<16x32xf32>
    %17 = arith.addf %15, %16 : vector<16x32xf32>
    %cst_21 = arith.constant 0.000000e+00 : f32
    %18 = vector.broadcast %cst_21 : f32 to vector<16x32xf32>
    %19 = arith.maximumf %17, %18 : vector<16x32xf32>
    %cst_22 = arith.constant dense<0.000000e+00> : vector<16xf32>
    %20 = vector.multi_reduction <add>, %19, %cst_22 [1] : vector<16x32xf32> to vector<16xf32>
    %21 = vector.shape_cast %20 : vector<16xf32> to vector<16x1xf32>
    %cst_23 = arith.constant 3.200000e+01 : f32
    %22 = vector.broadcast %cst_23 : f32 to vector<16x1xf32>
    %23 = arith.divf %21, %22 : vector<16x1xf32>
    %24 = vector.broadcast %23 : vector<16x1xf32> to vector<16x32xf32>
    %25 = arith.subf %19, %24 : vector<16x32xf32>
    %26 = arith.mulf %25, %25 : vector<16x32xf32>
    %cst_24 = arith.constant dense<0.000000e+00> : vector<16xf32>
    %27 = vector.multi_reduction <add>, %26, %cst_24 [1] : vector<16x32xf32> to vector<16xf32>
    %28 = vector.shape_cast %27 : vector<16xf32> to vector<16x1xf32>
    %cst_25 = arith.constant 3.200000e+01 : f32
    %29 = vector.broadcast %cst_25 : f32 to vector<16x1xf32>
    %30 = arith.divf %28, %29 : vector<16x1xf32>
    %31 = vector.broadcast %23 : vector<16x1xf32> to vector<16x32xf32>
    %32 = arith.subf %19, %31 : vector<16x32xf32>
    %cst_26 = arith.constant 9.99999974E-6 : f32
    %33 = vector.broadcast %cst_26 : f32 to vector<16x1xf32>
    %34 = arith.addf %30, %33 : vector<16x1xf32>
    %35 = math.rsqrt %34 : vector<16x1xf32>
    %36 = vector.broadcast %35 : vector<16x1xf32> to vector<16x32xf32>
    %37 = arith.mulf %32, %36 : vector<16x32xf32>
    %38 = vector.broadcast %3 : vector<1x32xf32> to vector<16x32xf32>
    %39 = arith.mulf %37, %38 : vector<16x32xf32>
    %40 = vector.broadcast %4 : vector<1x32xf32> to vector<16x32xf32>
    %41 = arith.addf %39, %40 : vector<16x32xf32>
    %42 = tpu.iota {dimensions = array<i32: 0>} : vector<16x1xi32>
    %c16_i32 = arith.constant 16 : i32
    %43 = vector.broadcast %c16_i32 : i32 to vector<16x1xi32>
    %44 = arith.remsi %42, %43 : vector<16x1xi32>
    %c8_i32 = arith.constant 8 : i32
    %45 = vector.broadcast %c8_i32 : i32 to vector<16x1xi32>
    %46 = arith.cmpi slt, %44, %45 : vector<16x1xi32>
    %cst_27 = arith.constant 0.000000e+00 : f32
    %47 = vector.shape_cast %46 : vector<16x1xi1> to vector<16x1xi1>
    %48 = vector.broadcast %47 : vector<16x1xi1> to vector<16x32xi1>
    %49 = vector.broadcast %cst_27 : f32 to vector<16x32xf32>
    %50 = arith.select %48, %41, %49 : vector<16x32xi1>, vector<16x32xf32>
    %c1_i32_28 = arith.constant 1 : i32
    %51 = tpu.dynamic_rotate %50 by %c1_i32_28 dim 0 : vector<16x32xf32>, i32 -> vector<16x32xf32>
    %c15_i32_29 = arith.constant 15 : i32
    %52 = tpu.dynamic_rotate %50 by %c15_i32_29 dim 0 : vector<16x32xf32>, i32 -> vector<16x32xf32>
    %53 = tpu.concatenate %51, %50, %52 in 1 : vector<16x32xf32>, vector<16x32xf32>, vector<16x32xf32> -> vector<16x96xf32>
    %54 = arith.truncf %53 : vector<16x96xf32> to vector<16x96xbf16>
    %cst_30 = arith.constant dense<0.000000e+00> : vector<16x32xf32>
    %55 = tpu.matmul %54, %5, %cst_30 {dimension_numbers = #tpu.dot_dimension_numbers<[1], [0], [0], [1], [0, 0, 1, 1], [], []>} : vector<16x96xbf16>, vector<96x32xbf16>, vector<16x32xf32> -> vector<16x32xf32>
    %56 = vector.broadcast %6 : vector<1x32xf32> to vector<16x32xf32>
    %57 = arith.addf %55, %56 : vector<16x32xf32>
    %cst_31 = arith.constant 0.000000e+00 : f32
    %58 = vector.broadcast %cst_31 : f32 to vector<16x32xf32>
    %59 = arith.maximumf %57, %58 : vector<16x32xf32>
    %cst_32 = arith.constant dense<0.000000e+00> : vector<16xf32>
    %60 = vector.multi_reduction <add>, %59, %cst_32 [1] : vector<16x32xf32> to vector<16xf32>
    %61 = vector.shape_cast %60 : vector<16xf32> to vector<16x1xf32>
    %cst_33 = arith.constant 3.200000e+01 : f32
    %62 = vector.broadcast %cst_33 : f32 to vector<16x1xf32>
    %63 = arith.divf %61, %62 : vector<16x1xf32>
    %64 = vector.broadcast %63 : vector<16x1xf32> to vector<16x32xf32>
    %65 = arith.subf %59, %64 : vector<16x32xf32>
    %66 = arith.mulf %65, %65 : vector<16x32xf32>
    %cst_34 = arith.constant dense<0.000000e+00> : vector<16xf32>
    %67 = vector.multi_reduction <add>, %66, %cst_34 [1] : vector<16x32xf32> to vector<16xf32>
    %68 = vector.shape_cast %67 : vector<16xf32> to vector<16x1xf32>
    %cst_35 = arith.constant 3.200000e+01 : f32
    %69 = vector.broadcast %cst_35 : f32 to vector<16x1xf32>
    %70 = arith.divf %68, %69 : vector<16x1xf32>
    %71 = vector.broadcast %63 : vector<16x1xf32> to vector<16x32xf32>
    %72 = arith.subf %59, %71 : vector<16x32xf32>
    %cst_36 = arith.constant 9.99999974E-6 : f32
    %73 = vector.broadcast %cst_36 : f32 to vector<16x1xf32>
    %74 = arith.addf %70, %73 : vector<16x1xf32>
    %75 = math.rsqrt %74 : vector<16x1xf32>
    %76 = vector.broadcast %75 : vector<16x1xf32> to vector<16x32xf32>
    %77 = arith.mulf %72, %76 : vector<16x32xf32>
    %78 = vector.broadcast %7 : vector<1x32xf32> to vector<16x32xf32>
    %79 = arith.mulf %77, %78 : vector<16x32xf32>
    %80 = vector.broadcast %8 : vector<1x32xf32> to vector<16x32xf32>
    %81 = arith.addf %79, %80 : vector<16x32xf32>
    %82 = arith.truncf %81 : vector<16x32xf32> to vector<16x32xbf16>
    %cst_37 = arith.constant dense<0.000000e+00> : vector<16x1xf32>
    %83 = tpu.matmul %82, %9, %cst_37 {dimension_numbers = #tpu.dot_dimension_numbers<[1], [0], [0], [1], [0, 0, 1, 1], [], []>} : vector<16x32xbf16>, vector<32x1xbf16>, vector<16x1xf32> -> vector<16x1xf32>
    %84 = vector.broadcast %10 : vector<1x1xf32> to vector<16x1xf32>
    %85 = arith.addf %83, %84 : vector<16x1xf32>
    %c0_38 = arith.constant 0 : index
    %c0_39 = arith.constant 0 : index
    %86 = vector.load %arg12[%c0_38, %c0_39] : memref<16x1xf32, #tpu.memory_space<vmem>>, vector<16x1xf32>
    tpu.vector_store %arg12[%c0_38, %c0_39], %85 {strides = array<i32>} : memref<16x1xf32, #tpu.memory_space<vmem>>, vector<16x1xf32>,
    return
  }
  func.func @transform_0(%arg0: i32) -> (i32, i32) {
    %c0_i32 = arith.constant 0 : i32
    %c0_i32_0 = arith.constant 0 : i32
    return %arg0, %c0_i32 : i32, i32
  }
  func.func @transform_1(%arg0: i32) -> (i32, i32) {
    %c0_i32 = arith.constant 0 : i32
    %c0_i32_0 = arith.constant 0 : i32
    %c0_i32_1 = arith.constant 0 : i32
    return %c0_i32, %c0_i32_0 : i32, i32
  }
  func.func @transform_2(%arg0: i32) -> (i32, i32) {
    %c0_i32 = arith.constant 0 : i32
    %c0_i32_0 = arith.constant 0 : i32
    %c0_i32_1 = arith.constant 0 : i32
    return %c0_i32, %c0_i32_0 : i32, i32
  }
  func.func @transform_3(%arg0: i32) -> (i32, i32) {
    %c0_i32 = arith.constant 0 : i32
    %c0_i32_0 = arith.constant 0 : i32
    %c0_i32_1 = arith.constant 0 : i32
    return %c0_i32, %c0_i32_0 : i32, i32
  }
  func.func @transform_4(%arg0: i32) -> (i32, i32) {
    %c0_i32 = arith.constant 0 : i32
    %c0_i32_0 = arith.constant 0 : i32
    %c0_i32_1 = arith.constant 0 : i32
    return %c0_i32, %c0_i32_0 : i32, i32
  }
  func.func @transform_5(%arg0: i32) -> (i32, i32) {
    %c0_i32 = arith.constant 0 : i32
    %c0_i32_0 = arith.constant 0 : i32
    %c0_i32_1 = arith.constant 0 : i32
    return %c0_i32, %c0_i32_0 : i32, i32
  }
  func.func @transform_6(%arg0: i32) -> (i32, i32) {
    %c0_i32 = arith.constant 0 : i32
    %c0_i32_0 = arith.constant 0 : i32
    %c0_i32_1 = arith.constant 0 : i32
    return %c0_i32, %c0_i32_0 : i32, i32
  }
  func.func @transform_7(%arg0: i32) -> (i32, i32) {
    %c0_i32 = arith.constant 0 : i32
    %c0_i32_0 = arith.constant 0 : i32
    %c0_i32_1 = arith.constant 0 : i32
    return %c0_i32, %c0_i32_0 : i32, i32
  }
  func.func @transform_8(%arg0: i32) -> (i32, i32) {
    %c0_i32 = arith.constant 0 : i32
    %c0_i32_0 = arith.constant 0 : i32
    %c0_i32_1 = arith.constant 0 : i32
    return %c0_i32, %c0_i32_0 : i32, i32
  }
  func.func @transform_9(%arg0: i32) -> (i32, i32) {
    %c0_i32 = arith.constant 0 : i32
    %c0_i32_0 = arith.constant 0 : i32
    %c0_i32_1 = arith.constant 0 : i32
    return %c0_i32, %c0_i32_0 : i32, i32
  }
  func.func @transform_10(%arg0: i32) -> (i32, i32) {
    %c0_i32 = arith.constant 0 : i32
    %c0_i32_0 = arith.constant 0 : i32
    %c0_i32_1 = arith.constant 0 : i32
    return %c0_i32, %c0_i32_0 : i32, i32
  }
  func.func @transform_11(%arg0: i32) -> (i32, i32) {
    %c0_i32 = arith.constant 0 : i32
    %c0_i32_0 = arith.constant 0 : i32
    return %arg0, %c0_i32 : i32, i32
  }
}

</mosaic_0001>

<llo_original>
// kernel: tpu_custom_call.1
$region0: #{tpu_custom_call.1}
  #allocation0 [shape = 'u32[]', space=smem, size = 0x4, offset = 0x4, fixed_abs, tag = 'smem constant byte address 0x4 - core index']
  #allocation1 [shape = 'u32[144,128]{1,0:T(1,128)}', space=vmem, size = 0x12000, scoped, tag = 'internal scratch']
  #allocation2 [shape = 'f32[1,1]{1,0:T(1,128)S(1)}', space=vmem, size = 0x200, scoped, tag = 'scoped memory for tpu_custom_call.1']
  %s0 = inlined_call_operand.vmem [shape: f32[32,32], index: 0, kind: input, shape index: {}]
  %s1 = inlined_call_operand.vmem [shape: bf16[96,32], index: 1, kind: input, shape index: {}]
  %s2 = inlined_call_operand.vmem [shape: f32[1,32], index: 2, kind: input, shape index: {}]
  %s3 = inlined_call_operand.vmem [shape: f32[1,32], index: 3, kind: input, shape index: {}]
  %s4 = inlined_call_operand.vmem [shape: f32[1,32], index: 4, kind: input, shape index: {}]
  %s5 = inlined_call_operand.vmem [shape: bf16[96,32], index: 5, kind: input, shape index: {}]
  %s6 = inlined_call_operand.vmem [shape: f32[1,32], index: 6, kind: input, shape index: {}]
  %s7 = inlined_call_operand.vmem [shape: f32[1,32], index: 7, kind: input, shape index: {}]
  %s8 = inlined_call_operand.vmem [shape: f32[1,32], index: 8, kind: input, shape index: {}]
  %s9 = inlined_call_operand.vmem [shape: bf16[32,1], index: 9, kind: input, shape index: {}]
  %s10 = inlined_call_operand.<no memory space> [shape: f32[1,1], index: 10, kind: input, shape index: {}]
  %s11 = inlined_call_operand.vmem [shape: f32[32,1], index: 11, kind: output, shape index: {}]
  %s12 = sld [smem:[#allocation0]]
  $region77: #{tpu_custom_call.1} parent=0
    _
  %s14 = ssub.s32 1, %s12
  %s15 = scalar_select 0, %s14, %s12
  %v16 = vstv %s10
  %17 = vst [vmem:[#allocation2] sm:$0x1] %v16
  loop: start=0, step=1, limit=4
  $region2: #{tpu_custom_call.1} parent=0 // loop_pre_header
    _
  $region3: #{tpu_custom_call.1} parent=0 // loop_header
    %s19 = sphi 0, %s23
    %p20 = scmp.ge.s32.totalorder %s19, 4
    %s29 = sphi 0, %s31
    %s32 = sphi 0, %s29
    %s33 = sphi 0, %s32
    %s49 = sphi 0, %s33
    %s53 = sphi 0, %s53
    %s55 = sphi 0, %s53
    %s56 = sphi 0, %s55
    %s70 = sphi 0, %s56
    %s74 = sphi 0, %s74
    %s76 = sphi 0, %s74
    %s77 = sphi 0, %s76
    %s91 = sphi 0, %s77
    %s95 = sphi 0, %s95
    %s97 = sphi 0, %s95
    %s98 = sphi 0, %s97
    %s112 = sphi 0, %s98
    %s116 = sphi 0, %s116
    %s118 = sphi 0, %s116
    %s119 = sphi 0, %s118
    %s133 = sphi 0, %s119
    %s137 = sphi 0, %s137
    %s139 = sphi 0, %s137
    %s140 = sphi 0, %s139
    %s154 = sphi 0, %s140
    %s158 = sphi 0, %s158
    %s160 = sphi 0, %s158
    %s161 = sphi 0, %s160
    %s175 = sphi 0, %s161
    %s179 = sphi 0, %s179
    %s181 = sphi 0, %s179
    %s182 = sphi 0, %s181
    %s196 = sphi 0, %s182
    %s200 = sphi 0, %s200
    %s202 = sphi 0, %s200
    %s203 = sphi 0, %s202
    %s217 = sphi 0, %s203
    %s221 = sphi 0, %s221
    %s223 = sphi 0, %s221
    %s224 = sphi 0, %s223
    %s238 = sphi 0, %s224
    %s242 = sphi 0, %s242
    %s244 = sphi 0, %s242
    %s245 = sphi 0, %s244
    %s259 = sphi 0, %s245
    %s265 = sphi 0, %s267
    %s268 = sphi 0, %s265
    %s269 = sphi 0, %s268
    %s285 = sphi 0, %s269
  $region4: #{tpu_custom_call.1} parent=0 // loop_header_branch
    %22 = sbr.rel (%p20) target = $region8
  $region5: #{tpu_custom_call.1} parent=0 // loop_body
    %s24 = ssub.s32 %s19, 1
    %s25 = ssub.s32 %s19, 2
    %s26 = sadd.s32 %s19, 1
    %s27 = ssub.s32 %s19, %s26
    %p28 = scmp.eq.s32.totalorder %s27, 0
    %s30 = sadd.s32 %s29, 1
    %s31 = scalar_select %p28, %s29, %s30
    %p34 = pneg %p28
    %p35 = scmp.eq.s32.totalorder %s19, 1
    %p36 = por %p34, %p35
    %p37 = scmp.ne.s32.totalorder %s29, %s32
    %p38 = scmp.eq.s32.totalorder %s19, 0
    %p39 = por %p37, %p38
    %p40 = scmp.ne.s32.totalorder %s29, %s32
    %p41 = scmp.eq.s32.totalorder %s24, 1
    %p42 = por %p40, %p41
    %p43 = scmp.ne.s32.totalorder %s32, %s33
    %p44 = scmp.eq.s32.totalorder %s24, 0
    %p45 = por %p43, %p44
    %p46 = scmp.ne.s32.totalorder %s32, %s33
    %p47 = scmp.eq.s32.totalorder %s25, 1
    %p48 = por %p46, %p47
    %p50 = scmp.ne.s32.totalorder %s33, %s49
    %p51 = scmp.eq.s32.totalorder %s25, 0
    %p52 = por %p50, %p51
    %s54 = sadd.s32 %s53, 1
    %p57 = scmp.eq.s32.totalorder %s19, 1
    %p58 = scmp.ne.s32.totalorder %s53, %s55
    %p59 = scmp.eq.s32.totalorder %s19, 0
    %p60 = por %p58, %p59
    %p61 = scmp.ne.s32.totalorder %s53, %s55
    %p62 = scmp.eq.s32.totalorder %s24, 1
    %p63 = por %p61, %p62
    %p64 = scmp.ne.s32.totalorder %s55, %s56
    %p65 = scmp.eq.s32.totalorder %s24, 0
    %p66 = por %p64, %p65
    %p67 = scmp.ne.s32.totalorder %s55, %s56
    %p68 = scmp.eq.s32.totalorder %s25, 1
    %p69 = por %p67, %p68
    %p71 = scmp.ne.s32.totalorder %s56, %s70
    %p72 = scmp.eq.s32.totalorder %s25, 0
    %p73 = por %p71, %p72
    %s75 = sadd.s32 %s74, 1
    %p78 = scmp.eq.s32.totalorder %s19, 1
    %p79 = scmp.ne.s32.totalorder %s74, %s76
    %p80 = scmp.eq.s32.totalorder %s19, 0
    %p81 = por %p79, %p80
    %p82 = scmp.ne.s32.totalorder %s74, %s76
    %p83 = scmp.eq.s32.totalorder %s24, 1
    %p84 = por %p82, %p83
    %p85 = scmp.ne.s32.totalorder %s76, %s77
    %p86 = scmp.eq.s32.totalorder %s24, 0
    %p87 = por %p85, %p86
    %p88 = scmp.ne.s32.totalorder %s76, %s77
    %p89 = scmp.eq.s32.totalorder %s25, 1
    %p90 = por %p88, %p89
    %p92 = scmp.ne.s32.totalorder %s77, %s91
    %p93 = scmp.eq.s32.totalorder %s25, 0
    %p94 = por %p92, %p93
    %s96 = sadd.s32 %s95, 1
    %p99 = scmp.eq.s32.totalorder %s19, 1
    %p100 = scmp.ne.s32.totalorder %s95, %s97
    %p101 = scmp.eq.s32.totalorder %s19, 0
    %p102 = por %p100, %p101
    %p103 = scmp.ne.s32.totalorder %s95, %s97
    %p104 = scmp.eq.s32.totalorder %s24, 1
    %p105 = por %p103, %p104
    %p106 = scmp.ne.s32.totalorder %s97, %s98
    %p107 = scmp.eq.s32.totalorder %s24, 0
    %p108 = por %p106, %p107
    %p109 = scmp.ne.s32.totalorder %s97, %s98
    %p110 = scmp.eq.s32.totalorder %s25, 1
    %p111 = por %p109, %p110
    %p113 = scmp.ne.s32.totalorder %s98, %s112
    %p114 = scmp.eq.s32.totalorder %s25, 0
    %p115 = por %p113, %p114
    %s117 = sadd.s32 %s116, 1
    %p120 = scmp.eq.s32.totalorder %s19, 1
    %p121 = scmp.ne.s32.totalorder %s116, %s118
    %p122 = scmp.eq.s32.totalorder %s19, 0
    %p123 = por %p121, %p122
    %p124 = scmp.ne.s32.totalorder %s116, %s118
    %p125 = scmp.eq.s32.totalorder %s24, 1
    %p126 = por %p124, %p125
    %p127 = scmp.ne.s32.totalorder %s118, %s119
    %p128 = scmp.eq.s32.totalorder %s24, 0
    %p129 = por %p127, %p128
    %p130 = scmp.ne.s32.totalorder %s118, %s119
    %p131 = scmp.eq.s32.totalorder %s25, 1
    %p132 = por %p130, %p131
    %p134 = scmp.ne.s32.totalorder %s119, %s133
    %p135 = scmp.eq.s32.totalorder %s25, 0
    %p136 = por %p134, %p135
    %s138 = sadd.s32 %s137, 1
    %p141 = scmp.eq.s32.totalorder %s19, 1
    %p142 = scmp.ne.s32.totalorder %s137, %s139
    %p143 = scmp.eq.s32.totalorder %s19, 0
    %p144 = por %p142, %p143
    %p145 = scmp.ne.s32.totalorder %s137, %s139
    %p146 = scmp.eq.s32.totalorder %s24, 1
    %p147 = por %p145, %p146
    %p148 = scmp.ne.s32.totalorder %s139, %s140
    %p149 = scmp.eq.s32.totalorder %s24, 0
    %p150 = por %p148, %p149
    %p151 = scmp.ne.s32.totalorder %s139, %s140
    %p152 = scmp.eq.s32.totalorder %s25, 1
    %p153 = por %p151, %p152
    %p155 = scmp.ne.s32.totalorder %s140, %s154
    %p156 = scmp.eq.s32.totalorder %s25, 0
    %p157 = por %p155, %p156
    %s159 = sadd.s32 %s158, 1
    %p162 = scmp.eq.s32.totalorder %s19, 1
    %p163 = scmp.ne.s32.totalorder %s158, %s160
    %p164 = scmp.eq.s32.totalorder %s19, 0
    %p165 = por %p163, %p164
    %p166 = scmp.ne.s32.totalorder %s158, %s160
    %p167 = scmp.eq.s32.totalorder %s24, 1
    %p168 = por %p166, %p167
    %p169 = scmp.ne.s32.totalorder %s160, %s161
    %p170 = scmp.eq.s32.totalorder %s24, 0
    %p171 = por %p169, %p170
    %p172 = scmp.ne.s32.totalorder %s160, %s161
    %p173 = scmp.eq.s32.totalorder %s25, 1
    %p174 = por %p172, %p173
    %p176 = scmp.ne.s32.totalorder %s161, %s175
    %p177 = scmp.eq.s32.totalorder %s25, 0
    %p178 = por %p176, %p177
    %s180 = sadd.s32 %s179, 1
    %p183 = scmp.eq.s32.totalorder %s19, 1
    %p184 = scmp.ne.s32.totalorder %s179, %s181
    %p185 = scmp.eq.s32.totalorder %s19, 0
    %p186 = por %p184, %p185
    %p187 = scmp.ne.s32.totalorder %s179, %s181
    %p188 = scmp.eq.s32.totalorder %s24, 1
    %p189 = por %p187, %p188
    %p190 = scmp.ne.s32.totalorder %s181, %s182
    %p191 = scmp.eq.s32.totalorder %s24, 0
    %p192 = por %p190, %p191
    %p193 = scmp.ne.s32.totalorder %s181, %s182
    %p194 = scmp.eq.s32.totalorder %s25, 1
    %p195 = por %p193, %p194
    %p197 = scmp.ne.s32.totalorder %s182, %s196
    %p198 = scmp.eq.s32.totalorder %s25, 0
    %p199 = por %p197, %p198
    %s201 = sadd.s32 %s200, 1
    %p204 = scmp.eq.s32.totalorder %s19, 1
    %p205 = scmp.ne.s32.totalorder %s200, %s202
    %p206 = scmp.eq.s32.totalorder %s19, 0
    %p207 = por %p205, %p206
    %p208 = scmp.ne.s32.totalorder %s200, %s202
    %p209 = scmp.eq.s32.totalorder %s24, 1
    %p210 = por %p208, %p209
    %p211 = scmp.ne.s32.totalorder %s202, %s203
    %p212 = scmp.eq.s32.totalorder %s24, 0
    %p213 = por %p211, %p212
    %p214 = scmp.ne.s32.totalorder %s202, %s203
    %p215 = scmp.eq.s32.totalorder %s25, 1
    %p216 = por %p214, %p215
    %p218 = scmp.ne.s32.totalorder %s203, %s217
    %p219 = scmp.eq.s32.totalorder %s25, 0
    %p220 = por %p218, %p219
    %s222 = sadd.s32 %s221, 1
    %p225 = scmp.eq.s32.totalorder %s19, 1
    %p226 = scmp.ne.s32.totalorder %s221, %s223
    %p227 = scmp.eq.s32.totalorder %s19, 0
    %p228 = por %p226, %p227
    %p229 = scmp.ne.s32.totalorder %s221, %s223
    %p230 = scmp.eq.s32.totalorder %s24, 1
    %p231 = por %p229, %p230
    %p232 = scmp.ne.s32.totalorder %s223, %s224
    %p233 = scmp.eq.s32.totalorder %s24, 0
    %p234 = por %p232, %p233
    %p235 = scmp.ne.s32.totalorder %s223, %s224
    %p236 = scmp.eq.s32.totalorder %s25, 1
    %p237 = por %p235, %p236
    %p239 = scmp.ne.s32.totalorder %s224, %s238
    %p240 = scmp.eq.s32.totalorder %s25, 0
    %p241 = por %p239, %p240
    %s243 = sadd.s32 %s242, 1
    %p246 = scmp.eq.s32.totalorder %s19, 1
    %p247 = scmp.ne.s32.totalorder %s242, %s244
    %p248 = scmp.eq.s32.totalorder %s19, 0
    %p249 = por %p247, %p248
    %p250 = scmp.ne.s32.totalorder %s242, %s244
    %p251 = scmp.eq.s32.totalorder %s24, 1
    %p252 = por %p250, %p251
    %p253 = scmp.ne.s32.totalorder %s244, %s245
    %p254 = scmp.eq.s32.totalorder %s24, 0
    %p255 = por %p253, %p254
    %p256 = scmp.ne.s32.totalorder %s244, %s245
    %p257 = scmp.eq.s32.totalorder %s25, 1
    %p258 = por %p256, %p257
    %p260 = scmp.ne.s32.totalorder %s245, %s259
    %p261 = scmp.eq.s32.totalorder %s25, 0
    %p262 = por %p260, %p261
    %s263 = ssub.s32 %s19, %s26
    %p264 = scmp.eq.s32.totalorder %s263, 0
    %s266 = sadd.s32 %s265, 1
    %s267 = scalar_select %p264, %s265, %s266
    %p270 = pneg %p264
    %p271 = scmp.eq.s32.totalorder %s19, 1
    %p272 = por %p270, %p271
    %p273 = scmp.ne.s32.totalorder %s265, %s268
    %p274 = scmp.eq.s32.totalorder %s19, 0
    %p275 = por %p273, %p274
    %p276 = scmp.ne.s32.totalorder %s265, %s268
    %p277 = scmp.eq.s32.totalorder %s24, 1
    %p278 = por %p276, %p277
    %p279 = scmp.ne.s32.totalorder %s268, %s269
    %p280 = scmp.eq.s32.totalorder %s24, 0
    %p281 = por %p279, %p280
    %p282 = scmp.ne.s32.totalorder %s268, %s269
    %p283 = scmp.eq.s32.totalorder %s25, 1
    %p284 = por %p282, %p283
    %p286 = scmp.ne.s32.totalorder %s269, %s285
    %p287 = scmp.eq.s32.totalorder %s25, 0
    %p288 = por %p286, %p287
    %p289 = scmp.le.s32.totalorder 1, %s19
    %p290 = scmp.lt.s32.totalorder %s19, 3
    %p291 = pnand %p289, %p290
    %p292 = pneg %p291
    // Predicated region
    $region9: #{tpu_custom_call.1} parent=5 // pred_check
      _
    $region10: #{tpu_custom_call.1} parent=5 // pred_check_branch
      %294 = sbr.rel (%p291) target = $region12
    $region11: #{tpu_custom_call.1} parent=5 // pred_region
      %s295 = ssub.s32 %s19, 1
      // Predicated region
      $region13: #{tpu_custom_call.1} parent=11 // pred_check
        %p296 = pneg %p66
      $region14: #{tpu_custom_call.1} parent=11 // pred_check_branch
        %298 = sbr.rel (%p296) target = $region16
      $region15: #{tpu_custom_call.1} parent=11 // pred_region
        _
      $region16: #{tpu_custom_call.1} parent=11 // pred_fallthru
        _
      // Predicated region
      $region17: #{tpu_custom_call.1} parent=11 // pred_check
        %p299 = pneg %p87
      $region18: #{tpu_custom_call.1} parent=11 // pred_check_branch
        %301 = sbr.rel (%p299) target = $region20
      $region19: #{tpu_custom_call.1} parent=11 // pred_region
        _
      $region20: #{tpu_custom_call.1} parent=11 // pred_fallthru
        _
      // Predicated region
      $region21: #{tpu_custom_call.1} parent=11 // pred_check
        %p302 = pneg %p108
      $region22: #{tpu_custom_call.1} parent=11 // pred_check_branch
        %304 = sbr.rel (%p302) target = $region24
      $region23: #{tpu_custom_call.1} parent=11 // pred_region
        _
      $region24: #{tpu_custom_call.1} parent=11 // pred_fallthru
        _
      // Predicated region
      $region25: #{tpu_custom_call.1} parent=11 // pred_check
        %p305 = pneg %p129
      $region26: #{tpu_custom_call.1} parent=11 // pred_check_branch
        %307 = sbr.rel (%p305) target = $region28
      $region27: #{tpu_custom_call.1} parent=11 // pred_region
        _
      $region28: #{tpu_custom_call.1} parent=11 // pred_fallthru
        _
      // Predicated region
      $region29: #{tpu_custom_call.1} parent=11 // pred_check
        %p308 = pneg %p150
      $region30: #{tpu_custom_call.1} parent=11 // pred_check_branch
        %310 = sbr.rel (%p308) target = $region32
      $region31: #{tpu_custom_call.1} parent=11 // pred_region
        _
      $region32: #{tpu_custom_call.1} parent=11 // pred_fallthru
        _
      // Predicated region
      $region33: #{tpu_custom_call.1} parent=11 // pred_check
        %p311 = pneg %p171
      $region34: #{tpu_custom_call.1} parent=11 // pred_check_branch
        %313 = sbr.rel (%p311) target = $region36
      $region35: #{tpu_custom_call.1} parent=11 // pred_region
        _
      $region36: #{tpu_custom_call.1} parent=11 // pred_fallthru
        _
      // Predicated region
      $region37: #{tpu_custom_call.1} parent=11 // pred_check
        %p314 = pneg %p192
      $region38: #{tpu_custom_call.1} parent=11 // pred_check_branch
        %316 = sbr.rel (%p314) target = $region40
      $region39: #{tpu_custom_call.1} parent=11 // pred_region
        _
      $region40: #{tpu_custom_call.1} parent=11 // pred_fallthru
        _
      // Predicated region
      $region41: #{tpu_custom_call.1} parent=11 // pred_check
        %p317 = pneg %p213
      $region42: #{tpu_custom_call.1} parent=11 // pred_check_branch
        %319 = sbr.rel (%p317) target = $region44
      $region43: #{tpu_custom_call.1} parent=11 // pred_region
        _
      $region44: #{tpu_custom_call.1} parent=11 // pred_fallthru
        _
      // Predicated region
      $region45: #{tpu_custom_call.1} parent=11 // pred_check
        %p320 = pneg %p234
      $region46: #{tpu_custom_call.1} parent=11 // pred_check_branch
        %322 = sbr.rel (%p320) target = $region48
      $region47: #{tpu_custom_call.1} parent=11 // pred_region
        _
      $region48: #{tpu_custom_call.1} parent=11 // pred_fallthru
        _
      // Predicated region
      $region49: #{tpu_custom_call.1} parent=11 // pred_check
        %p323 = pneg %p255
      $region50: #{tpu_custom_call.1} parent=11 // pred_check_branch
        %325 = sbr.rel (%p323) target = $region52
      $region51: #{tpu_custom_call.1} parent=11 // pred_region
        _
      $region52: #{tpu_custom_call.1} parent=11 // pred_fallthru
        _
    $region12: #{tpu_custom_call.1} parent=5 // pred_fallthru
      _
    %p326 = scmp.lt.s32.totalorder %s19, 2
    // Predicated region
    $region53: #{tpu_custom_call.1} parent=5 // pred_check
      %p327 = pneg %p326
    $region54: #{tpu_custom_call.1} parent=5 // pred_check_branch
      %329 = sbr.rel (%p327) target = $region56
    $region55: #{tpu_custom_call.1} parent=5 // pred_region
      // Predicated region
      $region57: #{tpu_custom_call.1} parent=55 // pred_check
        %p330 = pneg %p39
      $region58: #{tpu_custom_call.1} parent=55 // pred_check_branch
        %332 = sbr.rel (%p330) target = $region60
      $region59: #{tpu_custom_call.1} parent=55 // pred_region
        %s333 = smul.u32 2, %s19
        %p334 = scmp.lt.s32.totalorder %s333, 3
        %s335 = scalar_select %p334, %s333, 3
        %s336 = smul.addr %s335, 8
        %s337 = scalar_lea.vmem %s0, %s336
        %s338 = smul.u32 2, %s19
      $region60: #{tpu_custom_call.1} parent=55 // pred_fallthru
        _
    $region56: #{tpu_custom_call.1} parent=5 // pred_fallthru
      _
    %p339 = scmp.le.s32.totalorder 1, %s19
    %p340 = scmp.lt.s32.totalorder %s19, 3
    %p341 = pnand %p339, %p340
    %p342 = pneg %p341
    // Predicated region
    $region61: #{tpu_custom_call.1} parent=5 // pred_check
      _
    $region62: #{tpu_custom_call.1} parent=5 // pred_check_branch
      %344 = sbr.rel (%p341) target = $region64
    $region63: #{tpu_custom_call.1} parent=5 // pred_region
      %s345 = ssub.s32 %s19, 1
      %s346 = smul.u32 2, %s24
      %p347 = scmp.lt.s32.totalorder %s346, 3
      %s348 = scalar_select %p347, %s346, 3
      %s349 = smul.addr %s348, 8
      %s350 = scalar_lea.vmem %s0, %s349
      %p351 = pneg %p45
      %p352 = pneg %p42
      %p353 = pneg %p66
      %p354 = pneg %p63
      %p355 = pneg %p87
      %p356 = pneg %p84
      %p357 = pneg %p108
      %p358 = pneg %p105
      %p359 = pneg %p129
      %p360 = pneg %p126
      %p361 = pneg %p150
      %p362 = pneg %p147
      %p363 = pneg %p171
      %p364 = pneg %p168
      %p365 = pneg %p192
      %p366 = pneg %p189
      %p367 = pneg %p213
      %p368 = pneg %p210
      %p369 = pneg %p234
      %p370 = pneg %p231
      %p371 = pneg %p255
      %p372 = pneg %p252
      %p373 = pneg %p281
      %p374 = pneg %p278
      %s375 = smul.u32 2, %s24
      %p376 = scmp.lt.s32.totalorder %s375, 3
      %s377 = scalar_select %p376, %s375, 3
      %s378 = smul.addr %s377, 8
      %s379 = scalar_lea.vmem %s11, %s378
      %s380 = smul.u32 2, %s24
      %p381 = scmp.lt.s32.totalorder %s380, 3
      %s382 = scalar_select %p381, %s380, 3
      %s383 = smul.addr %s382, 8
      %s384 = scalar_lea.vmem %s0, %s383
      %s385 = smul.u32 2, %s24
      %s386 = smul.u32 2, %s24
      %p387 = scmp.lt.s32.totalorder %s386, 3
      %s388 = scalar_select %p387, %s386, 3
      %s389 = smul.addr %s388, 8
      %s390 = scalar_lea.vmem %s11, %s389
      %s391 = smul.u32 2, %s24
      %v393 = vld [vmem:[%s384] sm:$0xff]
      %v394 = vld [vmem:[%s384 + $0x8] sm:$0xff]
      %v395 = vld [vmem:[%s1] sm:$0xf]
      %v396 = vld [vmem:[%s1 + $0x4] sm:$0xf]
      %v397 = vld [vmem:[%s1 + $0x8] sm:$0xf]
      %v398 = vld [vmem:[%s1 + $0xc] sm:$0xf]
      %v399 = vld [vmem:[%s1 + $0x10] sm:$0xf]
      %v400 = vld [vmem:[%s1 + $0x14] sm:$0xf]
      %v401 = vld [vmem:[%s1 + $0x18] sm:$0xf]
      %v402 = vld [vmem:[%s1 + $0x1c] sm:$0xf]
      %v403 = vld [vmem:[%s1 + $0x20] sm:$0xf]
      %v404 = vld [vmem:[%s1 + $0x24] sm:$0xf]
      %v405 = vld [vmem:[%s1 + $0x28] sm:$0xf]
      %v406 = vld [vmem:[%s1 + $0x2c] sm:$0xf]
      %v407 = vld [vmem:[%s2] sm:$0x1]
      %v408 = vld [vmem:[%s3] sm:$0x1]
      %v409 = vld [vmem:[%s4] sm:$0x1]
      %v410 = vld [vmem:[%s5] sm:$0xf]
      %v411 = vld [vmem:[%s5 + $0x4] sm:$0xf]
      %v412 = vld [vmem:[%s5 + $0x8] sm:$0xf]
      %v413 = vld [vmem:[%s5 + $0xc] sm:$0xf]
      %v414 = vld [vmem:[%s5 + $0x10] sm:$0xf]
      %v415 = vld [vmem:[%s5 + $0x14] sm:$0xf]
      %v416 = vld [vmem:[%s5 + $0x18] sm:$0xf]
      %v417 = vld [vmem:[%s5 + $0x1c] sm:$0xf]
      %v418 = vld [vmem:[%s5 + $0x20] sm:$0xf]
      %v419 = vld [vmem:[%s5 + $0x24] sm:$0xf]
      %v420 = vld [vmem:[%s5 + $0x28] sm:$0xf]
      %v421 = vld [vmem:[%s5 + $0x2c] sm:$0xf]
      %v422 = vld [vmem:[%s6] sm:$0x1]
      %v423 = vld [vmem:[%s7] sm:$0x1]
      %v424 = vld [vmem:[%s8] sm:$0x1]
      %v425 = vld [vmem:[%s9] sm:$0xf]
      %v426 = vld [vmem:[%s9 + $0x4] sm:$0xf]
      %v427 = vld [vmem:[%s9 + $0x8] sm:$0xf]
      %v428 = vld [vmem:[%s9 + $0xc] sm:$0xf]
      %v429 = vld [vmem:[#allocation2] sm:$0x1]
      %v430 = vrot.slane %v393, 7
      %v431 = vrot.slane %v394, 7
      %v432 = vlaneseq
      %v433 = vshrl.u32 %v432, 7
      %vm434 = vcmp.lt.s32.totalorder %v433, 1
      %v435 = vsel %vm434, %v430, %v431
      %v436 = vsel %vm434, %v431, %v430
      %v437 = vrot.slane %v393, 1
      %v438 = vrot.slane %v394, 1
      %vm439 = vcmp.lt.s32.totalorder %v433, 7
      %v440 = vsel %vm439, %v437, %v438
      %v441 = vsel %vm439, %v438, %v437
      %444 = vrot.lane.b32.xlu0 %v393, 32
      %v445 = vpop.permute.xlu0 %444
      %446 = vrot.lane.b32.xlu0 %v394, 32
      %v447 = vpop.permute.xlu0 %446
      %452 = vrot.lane.b32.xlu0 %v440, 64
      %v453 = vpop.permute.xlu0 %452
      %454 = vrot.lane.b32.xlu0 %v441, 64
      %v455 = vpop.permute.xlu0 %454
      %vm458 = vcmask 261120
      %v459 = vsel %vm458, %v436, %v445
      %v460 = vsel %vm458, %v435, %v447
      %vm461 = vcmask 523264
      %v462 = vsel %vm461, %v459, %v453
      %v463 = vsel %vm461, %v460, %v455
      %v464 = vpack.c.bf16 %v463, %v462
      %v466 = vlaneseq
      %v467 = vshrl.u32 %v466, 7
      %v468 = vsub.s32 0, %v467
      %v469 = vrot.slane %v407, %v468
      %v483 = vunpack.c.l.b16 %v395
      %v484 = vunpack.c.l.b16 %v396
      %v485 = vunpack.c.l.b16 %v397
      %v486 = vunpack.c.l.b16 %v398
      %v487 = vunpack.c.l.b16 %v399
      %v488 = vunpack.c.l.b16 %v400
      %v489 = vunpack.c.l.b16 %v401
      %v490 = vunpack.c.l.b16 %v402
      %v491 = vunpack.c.l.b16 %v403
      %v492 = vunpack.c.l.b16 %v404
      %v493 = vunpack.c.l.b16 %v405
      %v494 = vunpack.c.l.b16 %v406
      %v495 = vpack.c.b16 %v484, %v483
      %v496 = vpack.c.b16 %v486, %v485
      %v497 = vpack.c.b16 %v488, %v487
      %v498 = vpack.c.b16 %v490, %v489
      %v499 = vpack.c.b16 %v492, %v491
      %v500 = vpack.c.b16 %v494, %v493
      %vm507 = vcmask 785408
      %v509 = vsel %vm507, %v464, 0
      %511 = vmatprep.subr.bf16.mxu0 0
      %512 = vmatpush1.bf16.msra.mxu0 %v495
      %513 = vmatprep.subr.bf16.mxu0 0
      %514 = vmatpush1.bf16.msra.mxu0 %v496
      %515 = vmatprep.subr.bf16.mxu0 0
      %516 = vmatpush1.bf16.msra.mxu0 %v497
      %517 = vmatprep.subr.bf16.mxu0 0
      %518 = vmatpush1.bf16.msra.mxu0 %v498
      %519 = vmatprep.subr.bf16.mxu0 0
      %520 = vmatpush1.bf16.msra.mxu0 %v499
      %521 = vmatprep.subr.bf16.mxu0 0
      %522 = vmatpush1.bf16.msra.mxu0 %v500
      %523 = vmatprep.subr.bf16.mxu0 0
      %524 = vmatpush1.bf16.msra.mxu0 0
      %525 = vmatprep.subr.bf16.mxu0 0
      %526 = vmatpush1.bf16.msra.mxu0 0
      %527 = vmatprep.subr.bf16.mxu0 0
      %528 = vmatpush1.bf16.msra.mxu0 0
      %529 = vmatprep.subr.bf16.mxu0 0
      %530 = vmatpush1.bf16.msra.mxu0 0
      %531 = vmatprep.subr.bf16.mxu0 0
      %532 = vmatpush1.bf16.msra.mxu0 0
      %533 = vmatprep.subr.bf16.mxu0 0
      %534 = vmatpush1.bf16.msra.mxu0 0
      %535 = vmatprep.subr.bf16.mxu0 0
      %536 = vmatpush1.bf16.msra.mxu0 0
      %537 = vmatprep.subr.bf16.mxu0 0
      %538 = vmatpush1.bf16.msra.mxu0 0
      %539 = vmatprep.subr.bf16.mxu0 0
      %540 = vmatpush1.bf16.msra.mxu0 0
      %541 = vmatprep.subr.bf16.mxu0 0
      %542 = vmatpush1.bf16.msra.mxu0 0
      %543 = vmatprep.mubr.bf16.mxu0 0
      %544 = vmatmul.mubr.bf16.gmra.mrb[0].mxu0 %v509
      %v545 = vpop.f32.mrb[0].mxu0
      %v546 = vadd.f32 %v469, %v545
      %v547 = vpop.f32.mrb[0].mxu0
      %v548 = vpop.f32.mrb[0].mxu0
      %v549 = vadd.f32 %v469, %v548
      %v550 = vpop.f32.mrb[0].mxu0
      %551 = vdwg.mxu0
      %v552 = vmax.f32 %v546, 0.0
      %v553 = vmax.f32 %v549, 0.0
      %v554 = vsel %vm458, %v552, 0.0
      %555 = vadd.xlane.f32.xlu0 %v554
      %v556 = vpop.xlane.xlu0 %555
      %v557 = vsel %vm458, %v553, 0.0
      %558 = vadd.xlane.f32.xlu0 %v557
      %v559 = vpop.xlane.xlu0 %558
      %v560 = vrcp.pop 32.0
      %v561 = vmul.f32 %v556, %v560
      %v562 = vmul.f32 %v559, %v560
      %v563 = vsub.f32 %v552, %v561
      %v564 = vsub.f32 %v553, %v562
      %v565 = vmul.f32 %v563, %v563
      %v566 = vmul.f32 %v564, %v564
      %v567 = vsel %vm458, %v565, 0.0
      %568 = vadd.xlane.f32.xlu0 %v567
      %v569 = vpop.xlane.xlu0 %568
      %v570 = vsel %vm458, %v566, 0.0
      %571 = vadd.xlane.f32.xlu0 %v570
      %v572 = vpop.xlane.xlu0 %571
      %v573 = vmul.f32 %v569, %v560
      %v574 = vmul.f32 %v572, %v560
      %v575 = vadd.f32 %v573, 1e-05
      %v576 = vadd.f32 %v574, 1e-05
      %v577 = vrsqrt.pop %v575
      %v578 = vrsqrt.pop %v576
      %v579 = vmul.f32 %v563, %v577
      %v580 = vmul.f32 %v564, %v578
      %v582 = vlaneseq
      %v583 = vshrl.u32 %v582, 7
      %v584 = vsub.s32 0, %v583
      %v585 = vrot.slane %v408, %v584
      %v587 = vmul.f32 %v579, %v585
      %v588 = vmul.f32 %v580, %v585
      %v590 = vlaneseq
      %v591 = vshrl.u32 %v590, 7
      %v592 = vsub.s32 0, %v591
      %v593 = vrot.slane %v409, %v592
      %v595 = vadd.f32 %v587, %v593
      %v596 = vadd.f32 %v588, %v593
      %v597 = vadd.s32 %v433, 8
      %vm598 = vcmp.lt.s32.totalorder %v433, 0
      %v599 = vsub.s32 0, %v433
      %v600 = vsel %vm598, %v599, %v433
      %v601 = vshrl.u32 %v600, 4
      %v602 = vand.u32 %v600, 15
      %v603 = vsub.s32 0, %v602
      %v604 = vsel %vm598, %v603, %v602
      %vm605 = vcmp.lt.s32.totalorder %v597, 0
      %v606 = vsub.s32 0, %v597
      %v607 = vsel %vm605, %v606, %v597
      %v608 = vshrl.u32 %v607, 4
      %v609 = vand.u32 %v607, 15
      %v610 = vsub.s32 0, %v609
      %v611 = vsel %vm605, %v610, %v609
      %vm612 = vcmp.lt.s32.totalorder %v604, 8
      %vm613 = vcmp.lt.s32.totalorder %v611, 8
      %v614 = vsel %vm612, 1, 0
      %v615 = vsel %vm613, 1, 0
      %vm616 = vcmp.eq.s32.totalorder %v614, 1
      %vm617 = vcmp.eq.s32.totalorder %v615, 1
      %v618 = vsel %vm616, %v595, 0.0
      %v619 = vsel %vm617, %v596, 0.0
      %v620 = vrot.slane %v618, 7
      %v621 = vrot.slane %v619, 7
      %v622 = vsel %vm434, %v620, %v621
      %v623 = vsel %vm434, %v621, %v620
      %v624 = vrot.slane %v618, 1
      %v625 = vrot.slane %v619, 1
      %v626 = vsel %vm439, %v624, %v625
      %v627 = vsel %vm439, %v625, %v624
      %630 = vrot.lane.b32.xlu0 %v618, 32
      %v631 = vpop.permute.xlu0 %630
      %632 = vrot.lane.b32.xlu0 %v619, 32
      %v633 = vpop.permute.xlu0 %632
      %638 = vrot.lane.b32.xlu0 %v626, 64
      %v639 = vpop.permute.xlu0 %638
      %640 = vrot.lane.b32.xlu0 %v627, 64
      %v641 = vpop.permute.xlu0 %640
      %v644 = vsel %vm458, %v623, %v631
      %v645 = vsel %vm458, %v622, %v633
      %v646 = vsel %vm461, %v644, %v639
      %v647 = vsel %vm461, %v645, %v641
      %v648 = vpack.c.bf16 %v647, %v646
      %v650 = vlaneseq
      %v651 = vshrl.u32 %v650, 7
      %v652 = vsub.s32 0, %v651
      %v653 = vrot.slane %v422, %v652
      %v667 = vunpack.c.l.b16 %v410
      %v668 = vunpack.c.l.b16 %v411
      %v669 = vunpack.c.l.b16 %v412
      %v670 = vunpack.c.l.b16 %v413
      %v671 = vunpack.c.l.b16 %v414
      %v672 = vunpack.c.l.b16 %v415
      %v673 = vunpack.c.l.b16 %v416
      %v674 = vunpack.c.l.b16 %v417
      %v675 = vunpack.c.l.b16 %v418
      %v676 = vunpack.c.l.b16 %v419
      %v677 = vunpack.c.l.b16 %v420
      %v678 = vunpack.c.l.b16 %v421
      %v679 = vpack.c.b16 %v668, %v667
      %v680 = vpack.c.b16 %v670, %v669
      %v681 = vpack.c.b16 %v672, %v671
      %v682 = vpack.c.b16 %v674, %v673
      %v683 = vpack.c.b16 %v676, %v675
      %v684 = vpack.c.b16 %v678, %v677
      %v692 = vsel %vm507, %v648, 0
      %694 = vmatprep.subr.bf16.mxu0 0
      %695 = vmatpush1.bf16.msra.mxu0 %v679
      %696 = vmatprep.subr.bf16.mxu0 0
      %697 = vmatpush1.bf16.msra.mxu0 %v680
      %698 = vmatprep.subr.bf16.mxu0 0
      %699 = vmatpush1.bf16.msra.mxu0 %v681
      %700 = vmatprep.subr.bf16.mxu0 0
      %701 = vmatpush1.bf16.msra.mxu0 %v682
      %702 = vmatprep.subr.bf16.mxu0 0
      %703 = vmatpush1.bf16.msra.mxu0 %v683
      %704 = vmatprep.subr.bf16.mxu0 0
      %705 = vmatpush1.bf16.msra.mxu0 %v684
      %706 = vmatprep.subr.bf16.mxu0 0
      %707 = vmatpush1.bf16.msra.mxu0 0
      %708 = vmatprep.subr.bf16.mxu0 0
      %709 = vmatpush1.bf16.msra.mxu0 0
      %710 = vmatprep.subr.bf16.mxu0 0
      %711 = vmatpush1.bf16.msra.mxu0 0
      %712 = vmatprep.subr.bf16.mxu0 0
      %713 = vmatpush1.bf16.msra.mxu0 0
      %714 = vmatprep.subr.bf16.mxu0 0
      %715 = vmatpush1.bf16.msra.mxu0 0
      %716 = vmatprep.subr.bf16.mxu0 0
      %717 = vmatpush1.bf16.msra.mxu0 0
      %718 = vmatprep.subr.bf16.mxu0 0
      %719 = vmatpush1.bf16.msra.mxu0 0
      %720 = vmatprep.subr.bf16.mxu0 0
      %721 = vmatpush1.bf16.msra.mxu0 0
      %722 = vmatprep.subr.bf16.mxu0 0
      %723 = vmatpush1.bf16.msra.mxu0 0
      %724 = vmatprep.subr.bf16.mxu0 0
      %725 = vmatpush1.bf16.msra.mxu0 0
      %726 = vmatprep.mubr.bf16.mxu0 0
      %727 = vmatmul.mubr.bf16.gmra.mrb[0].mxu0 %v692
      %v728 = vpop.f32.mrb[0].mxu0
      %v729 = vadd.f32 %v653, %v728
      %v730 = vpop.f32.mrb[0].mxu0
      %v731 = vpop.f32.mrb[0].mxu0
      %v732 = vadd.f32 %v653, %v731
      %v733 = vpop.f32.mrb[0].mxu0
      %734 = vdwg.mxu0
      %v735 = vmax.f32 %v729, 0.0
      %v736 = vmax.f32 %v732, 0.0
      %v737 = vsel %vm458, %v735, 0.0
      %738 = vadd.xlane.f32.xlu0 %v737
      %v739 = vpop.xlane.xlu0 %738
      %v740 = vsel %vm458, %v736, 0.0
      %741 = vadd.xlane.f32.xlu0 %v740
      %v742 = vpop.xlane.xlu0 %741
      %v743 = vmul.f32 %v739, %v560
      %v744 = vmul.f32 %v742, %v560
      %v745 = vsub.f32 %v735, %v743
      %v746 = vsub.f32 %v736, %v744
      %v747 = vmul.f32 %v745, %v745
      %v748 = vmul.f32 %v746, %v746
      %v749 = vsel %vm458, %v747, 0.0
      %750 = vadd.xlane.f32.xlu0 %v749
      %v751 = vpop.xlane.xlu0 %750
      %v752 = vsel %vm458, %v748, 0.0
      %753 = vadd.xlane.f32.xlu0 %v752
      %v754 = vpop.xlane.xlu0 %753
      %v755 = vmul.f32 %v751, %v560
      %v756 = vmul.f32 %v754, %v560
      %v757 = vadd.f32 %v755, 1e-05
      %v758 = vadd.f32 %v756, 1e-05
      %v759 = vrsqrt.pop %v757
      %v760 = vrsqrt.pop %v758
      %v761 = vmul.f32 %v745, %v759
      %v762 = vmul.f32 %v746, %v760
      %v764 = vlaneseq
      %v765 = vshrl.u32 %v764, 7
      %v766 = vsub.s32 0, %v765
      %v767 = vrot.slane %v423, %v766
      %v769 = vmul.f32 %v761, %v767
      %v770 = vmul.f32 %v762, %v767
      %v772 = vlaneseq
      %v773 = vshrl.u32 %v772, 7
      %v774 = vsub.s32 0, %v773
      %v775 = vrot.slane %v424, %v774
      %v777 = vadd.f32 %v769, %v775
      %v778 = vadd.f32 %v770, %v775
      %v779 = vpack.c.bf16 %v778, %v777
      %v781 = vlaneseq
      %v782 = vshrl.u32 %v781, 7
      %v783 = vsub.s32 0, %v782
      %v784 = vrot.slane %v429, %v783
      %v790 = vunpack.c.l.b16 %v425
      %v791 = vunpack.c.l.b16 %v426
      %v792 = vunpack.c.l.b16 %v427
      %v793 = vunpack.c.l.b16 %v428
      %v794 = vpack.c.b16 %v791, %v790
      %v795 = vpack.c.b16 %v793, %v792
      %v799 = vsel %vm458, %v779, 0
      %801 = vmatprep.subr.bf16.mxu0 0
      %802 = vmatpush1.bf16.msra.mxu0 %v794
      %803 = vmatprep.subr.bf16.mxu0 0
      %804 = vmatpush1.bf16.msra.mxu0 %v795
      %805 = vmatprep.subr.bf16.mxu0 0
      %806 = vmatpush1.bf16.msra.mxu0 0
      %807 = vmatprep.subr.bf16.mxu0 0
      %808 = vmatpush1.bf16.msra.mxu0 0
      %809 = vmatprep.subr.bf16.mxu0 0
      %810 = vmatpush1.bf16.msra.mxu0 0
      %811 = vmatprep.subr.bf16.mxu0 0
      %812 = vmatpush1.bf16.msra.mxu0 0
      %813 = vmatprep.subr.bf16.mxu0 0
      %814 = vmatpush1.bf16.msra.mxu0 0
      %815 = vmatprep.subr.bf16.mxu0 0
      %816 = vmatpush1.bf16.msra.mxu0 0
      %817 = vmatprep.subr.bf16.mxu0 0
      %818 = vmatpush1.bf16.msra.mxu0 0
      %819 = vmatprep.subr.bf16.mxu0 0
      %820 = vmatpush1.bf16.msra.mxu0 0
      %821 = vmatprep.subr.bf16.mxu0 0
      %822 = vmatpush1.bf16.msra.mxu0 0
      %823 = vmatprep.subr.bf16.mxu0 0
      %824 = vmatpush1.bf16.msra.mxu0 0
      %825 = vmatprep.subr.bf16.mxu0 0
      %826 = vmatpush1.bf16.msra.mxu0 0
      %827 = vmatprep.subr.bf16.mxu0 0
      %828 = vmatpush1.bf16.msra.mxu0 0
      %829 = vmatprep.subr.bf16.mxu0 0
      %830 = vmatpush1.bf16.msra.mxu0 0
      %831 = vmatprep.subr.bf16.mxu0 0
      %832 = vmatpush1.bf16.msra.mxu0 0
      %833 = vmatprep.mubr.bf16.mxu0 0
      %834 = vmatmul.mubr.bf16.gmra.mrb[0].mxu0 %v799
      %v835 = vpop.f32.mrb[0].mxu0
      %v836 = vadd.f32 %v784, %v835
      %v837 = vpop.f32.mrb[0].mxu0
      %v838 = vpop.f32.mrb[0].mxu0
      %v839 = vadd.f32 %v784, %v838
      %v840 = vpop.f32.mrb[0].mxu0
      %841 = vdwg.mxu0
      %vm842 = vcmask 7168
      %843 = vst.msk [vmem:[%s390] sm:$0xff] %vm842, %v836
      %844 = vst.msk [vmem:[%s390 + $0x8] sm:$0xff] %vm842, %v839
      %s845 = smul.u32 2, %s24
      %p846 = scmp.lt.s32.totalorder %s845, 3
      %s847 = scalar_select %p846, %s845, 3
      %s848 = smul.addr %s847, 8
      %s849 = scalar_lea.vmem %s11, %s848
      // Predicated region
      $region65: #{tpu_custom_call.1} parent=63 // pred_check
        %p850 = pneg %p278
      $region66: #{tpu_custom_call.1} parent=63 // pred_check_branch
        %852 = sbr.rel (%p850) target = $region68
      $region67: #{tpu_custom_call.1} parent=63 // pred_region
        %s853 = smul.u32 2, %s24
      $region68: #{tpu_custom_call.1} parent=63 // pred_fallthru
        _
    $region64: #{tpu_custom_call.1} parent=5 // pred_fallthru
      _
    %p854 = scmp.le.s32.totalorder 2, %s19
    // Predicated region
    $region69: #{tpu_custom_call.1} parent=5 // pred_check
      %p855 = pneg %p854
    $region70: #{tpu_custom_call.1} parent=5 // pred_check_branch
      %857 = sbr.rel (%p855) target = $region72
    $region71: #{tpu_custom_call.1} parent=5 // pred_region
      %s858 = ssub.s32 %s19, 2
      // Predicated region
      $region73: #{tpu_custom_call.1} parent=71 // pred_check
        %p859 = pneg %p284
      $region74: #{tpu_custom_call.1} parent=71 // pred_check_branch
        %861 = sbr.rel (%p859) target = $region76
      $region75: #{tpu_custom_call.1} parent=71 // pred_region
        %s862 = smul.u32 2, %s25
        %p863 = scmp.lt.s32.totalorder %s862, 3
        %s864 = scalar_select %p863, %s862, 3
        %s865 = smul.addr %s864, 8
        %s866 = scalar_lea.vmem %s11, %s865
      $region76: #{tpu_custom_call.1} parent=71 // pred_fallthru
        _
    $region72: #{tpu_custom_call.1} parent=5 // pred_fallthru
      _
  $region6: #{tpu_custom_call.1} parent=0 // loop_footer
    %s23 = sadd.s32 1, %s19
  $region7: #{tpu_custom_call.1} parent=0 // loop_footer_branch
    %18 = sbr.rel target = $region3
  $region8: #{tpu_custom_call.1} parent=0 // loop_exit
    _

</llo_original>
